<compile_context>
chip_gen: v7x
topology: tpu7x:2x2x1
jax: 0.10.0
libtpu: 0.0.40
codegen_flags: <defaults>
</compile_context>

<pallas_src>
import jax
import jax.numpy as jnp
from jax import lax
from jax.experimental import pallas as pl
from jax.experimental.pallas import tpu as pltpu

# Problem sizes (small, consistent with the module's forward).
B, S, D = 2, 8, 32          # batch, seq, d_model
H = 4                       # attention heads
DK = D // H                 # head dim
DFF = 64                    # feed-forward hidden dim
N = B * S                   # flattened rows
EPS = 1e-6
LN_ALPHA = 1.0              # nn.Parameter(torch.ones(1))
LN_BIAS = 1.0               # nn.Parameter(torch.ones(1))  (per the spec)
NEG_INF = -1e9

# Packed-operand column offsets.
PROJ = 2 * D + H * D        # 192: fused projection = [Q | K | V'_0..V'_{H-1}]
W1_OFF = PROJ               # FF1 weight columns inside the packed weight slab
BO_OFF = PROJ               # bias-row offsets: [bq|bk|bv' | bo | b1 | b2]
B1_OFF = BO_OFF + D
B2_OFF = B1_OFF + DFF
B_TOT = B2_OFF + D          # 320


def _layernorm(x):
    # Matches the custom LayerNormalization: torch.std is unbiased (N-1),
    # and the denominator is (std + eps), not sqrt(var + eps).
    mean = jnp.mean(x, axis=-1, keepdims=True)
    var = jnp.sum((x - mean) ** 2, axis=-1, keepdims=True) / (x.shape[-1] - 1)
    std = jnp.sqrt(var)
    return LN_ALPHA * (x - mean) / (std + EPS) + LN_BIAS


def encoder_block_kernel(x_ref, mbias_ref, w_ref, b_ref, w2_ref, out_ref):
    x = x_ref[...]            # (N, D) flattened rows
    mbias = mbias_ref[...]    # (N, N) additive mask (cross-batch blocks = -1e9)

    # ---- residual connection 0: multi-head self-attention on LN(x) ----
    xn = _layernorm(x)
    # One fused projection: Q (scale pre-folded), K, and per-head V'=(V_h@Wo_h).
    proj = jnp.dot(xn, w_ref[:, :PROJ],
                   preferred_element_type=jnp.float32) + b_ref[:, :PROJ]

    attn = jnp.zeros((N, D), jnp.float32)
    for h in range(H):        # static unroll over heads — pure 2-D matmuls only
        q = proj[:, h * DK:(h + 1) * DK]                       # (N, DK)
        k = proj[:, D + h * DK: D + (h + 1) * DK]              # (N, DK)
        vp = proj[:, 2 * D + h * D: 2 * D + (h + 1) * D]       # (N, D) = V_h @ Wo_h
        # scores over the flattened (B*S) keys; mask bias kills cross-batch terms.
        s = lax.dot_general(q, k, (((1,), (1,)), ((), ())),
                            preferred_element_type=jnp.float32) + mbias
        s = s - jnp.max(s, axis=-1, keepdims=True)
        e = jnp.exp(s)
        p = e / jnp.sum(e, axis=-1, keepdims=True)             # exact softmax
        attn = attn + jnp.dot(p, vp, preferred_element_type=jnp.float32)
    x1 = x + attn + b_ref[:, BO_OFF:BO_OFF + D]   # dropout = identity (eval)

    # ---- residual connection 1: feed-forward on LN(x1) ----
    xn1 = _layernorm(x1)
    h1 = jnp.dot(xn1, w_ref[:, W1_OFF:W1_OFF + DFF],
                 preferred_element_type=jnp.float32) + b_ref[:, B1_OFF:B1_OFF + DFF]
    h1 = jnp.maximum(h1, 0.0)                                   # ReLU
    ff = jnp.dot(h1, w2_ref[...],
                 preferred_element_type=jnp.float32) + b_ref[:, B2_OFF:B2_OFF + D]
    out_ref[...] = x1 + ff


def encoder_block(x, mask, params):
    (wq, bq, wk, bk, wv, bv, wo, bo, w1, b1, w2, b2) = params
    scale = 1.0 / jnp.sqrt(jnp.float32(DK))

    # Fold Wo into per-head value weights (exact linear-algebra identity):
    #   (P_h @ (xn @ Wv_h + bv_h)) @ Wo_h == P_h @ (xn @ (Wv_h @ Wo_h) + bv_h @ Wo_h)
    wv_f, bv_f = [], []
    for h in range(H):
        wo_h = wo[h * DK:(h + 1) * DK, :]                     # (DK, D)
        wv_f.append(wv[:, h * DK:(h + 1) * DK] @ wo_h)        # (D, D)
        bv_f.append(bv[:, h * DK:(h + 1) * DK] @ wo_h)        # (1, D)

    # Packed weight slab (32,256) and bias row (1,320): 3 weight DMAs total.
    w_pack = jnp.concatenate([wq * scale, wk] + wv_f + [w1], axis=1)
    b_pack = jnp.concatenate([bq * scale, bk] + bv_f + [bo, b1, b2], axis=1)
    assert w_pack.shape == (D, PROJ + DFF) and b_pack.shape == (1, B_TOT)

    # Additive attention-mask bias over flattened (B*S) keys; cross-batch
    # blocks are -1e9 so per-head attention is a single 2-D matmul.
    mb = jnp.where(mask > 0, 0.0, NEG_INF).astype(jnp.float32)   # (B, S, S)
    mask_bias = jnp.full((N, N), NEG_INF, jnp.float32)
    for b in range(B):
        mask_bias = mask_bias.at[b * S:(b + 1) * S, b * S:(b + 1) * S].set(mb[b])

    x_flat = x.reshape(N, D).astype(jnp.float32)

    vmem = pl.BlockSpec(memory_space=pltpu.MemorySpace.VMEM)
    out = pl.pallas_call(
        encoder_block_kernel,
        out_shape=jax.ShapeDtypeStruct((N, D), jnp.float32),
        in_specs=[vmem, vmem, vmem, vmem, vmem],
        out_specs=vmem,
    )(x_flat, mask_bias, w_pack, b_pack, w2)
    return out.reshape(B, S, D)


def reference(x, mask, params):
    # Pure-JAX reference of the PyTorch math (unfused, for correctness check).
    (wq, bq, wk, bk, wv, bv, wo, bo, w1, b1, w2, b2) = params

    def ln(t):
        mean = jnp.mean(t, axis=-1, keepdims=True)
        std = jnp.sqrt(jnp.sum((t - mean) ** 2, axis=-1, keepdims=True) / (D - 1))
        return LN_ALPHA * (t - mean) / (std + EPS) + LN_BIAS

    xn = ln(x)
    q = (xn @ wq + bq[0]).reshape(B, S, H, DK).transpose(0, 2, 1, 3)
    k = (xn @ wk + bk[0]).reshape(B, S, H, DK).transpose(0, 2, 1, 3)
    v = (xn @ wv + bv[0]).reshape(B, S, H, DK).transpose(0, 2, 1, 3)
    scores = jnp.einsum('bhqd,bhkd->bhqk', q, k) / jnp.sqrt(jnp.float32(DK))
    scores = jnp.where(mask[:, None, :, :] > 0, scores, NEG_INF)
    p = jax.nn.softmax(scores, axis=-1)
    o = jnp.einsum('bhqk,bhkd->bhqd', p, v).transpose(0, 2, 1, 3).reshape(B, S, D)
    x1 = x + (o @ wo + bo[0])
    xn1 = ln(x1)
    ff = jnp.maximum(xn1 @ w1 + b1[0], 0.0) @ w2 + b2[0]
    return x1 + ff


def init_params(key):
    ks = jax.random.split(key, 6)

    def lin(kw, din, dout):
        w = 0.05 * jax.random.normal(kw, (din, dout), jnp.float32)
        b = 0.01 * jnp.ones((1, dout), jnp.float32)
        return w, b

    wq, bq = lin(ks[0], D, D)
    wk, bk = lin(ks[1], D, D)
    wv, bv = lin(ks[2], D, D)
    wo, bo = lin(ks[3], D, D)
    w1, b1 = lin(ks[4], D, DFF)
    w2, b2 = lin(ks[5], DFF, D)
    return (wq, bq, wk, bk, wv, bv, wo, bo, w1, b1, w2, b2)


if __name__ == "__main__":
    key = jax.random.PRNGKey(0)
    kx, kp = jax.random.split(key)
    x = jax.random.normal(kx, (B, S, D), jnp.float32)

    # src_mask: batch 0 attends everywhere; batch 1 masks the last 2 key positions.
    mask = jnp.ones((B, S, S), jnp.float32)
    mask = mask.at[1, :, S - 2:].set(0.0)

    params = init_params(kp)

    out = encoder_block(x, mask, params)
    out = jax.block_until_ready(out)

    ref = reference(x, mask, params)
    assert out.shape == (B, S, D)
    # Tolerance: weight pre-folding (scale into Wq, Wo into Wv) and the
    # flattened-key softmax change float summation order slightly; actual
    # error is ~1e-6 — 1e-4 leaves headroom while still catching real bugs.
    assert jnp.allclose(out, ref, atol=1e-4, rtol=1e-4), \
        f"max abs err {jnp.max(jnp.abs(out - ref))}"
    print("KERNEL_OK")
</pallas_src>

<mosaic_0001>
module attributes {stable_mosaic.version = 11 : i64} {
  func.func @encoder_block_kernel(%arg0: memref<16x32xf32, #tpu.memory_space<vmem>>, %arg1: memref<16x16xf32, #tpu.memory_space<vmem>>, %arg2: memref<32x256xf32, #tpu.memory_space<vmem>>, %arg3: memref<1x320xf32, #tpu.memory_space<vmem>>, %arg4: memref<64x32xf32, #tpu.memory_space<vmem>>, %arg5: memref<16x32xf32, #tpu.memory_space<vmem>>) attributes {dimension_semantics = [], scalar_prefetch = 0 : i64, scratch_operands = 0 : i64, tpu.core_type = #tpu.core_type<tc>} {
    %c0 = arith.constant 0 : index
    %c0_0 = arith.constant 0 : index
    %0 = vector.load %arg0[%c0, %c0_0] : memref<16x32xf32, #tpu.memory_space<vmem>>, vector<16x32xf32>
    %c0_1 = arith.constant 0 : index
    %c0_2 = arith.constant 0 : index
    %1 = vector.load %arg1[%c0_1, %c0_2] : memref<16x16xf32, #tpu.memory_space<vmem>>, vector<16x16xf32>
    %cst = arith.constant dense<0.000000e+00> : vector<16xf32>
    %2 = vector.multi_reduction <add>, %0, %cst [1] : vector<16x32xf32> to vector<16xf32>
    %3 = vector.shape_cast %2 : vector<16xf32> to vector<16x1xf32>
    %cst_3 = arith.constant 3.200000e+01 : f32
    %4 = vector.broadcast %cst_3 : f32 to vector<16x1xf32>
    %5 = arith.divf %3, %4 : vector<16x1xf32>
    %6 = vector.broadcast %5 : vector<16x1xf32> to vector<16x32xf32>
    %7 = arith.subf %0, %6 : vector<16x32xf32>
    %8 = arith.mulf %7, %7 : vector<16x32xf32>
    %cst_4 = arith.constant dense<0.000000e+00> : vector<16xf32>
    %9 = vector.multi_reduction <add>, %8, %cst_4 [1] : vector<16x32xf32> to vector<16xf32>
    %10 = vector.shape_cast %9 : vector<16xf32> to vector<16x1xf32>
    %cst_5 = arith.constant 3.100000e+01 : f32
    %11 = vector.broadcast %cst_5 : f32 to vector<16x1xf32>
    %12 = arith.divf %10, %11 : vector<16x1xf32>
    %13 = math.sqrt %12 : vector<16x1xf32>
    %14 = vector.broadcast %5 : vector<16x1xf32> to vector<16x32xf32>
    %15 = arith.subf %0, %14 : vector<16x32xf32>
    %cst_6 = arith.constant 1.000000e+00 : f32
    %16 = vector.broadcast %cst_6 : f32 to vector<16x32xf32>
    %17 = arith.mulf %16, %15 : vector<16x32xf32>
    %cst_7 = arith.constant 9.99999997E-7 : f32
    %18 = vector.broadcast %cst_7 : f32 to vector<16x1xf32>
    %19 = arith.addf %13, %18 : vector<16x1xf32>
    %20 = vector.broadcast %19 : vector<16x1xf32> to vector<16x32xf32>
    %21 = arith.divf %17, %20 : vector<16x32xf32>
    %cst_8 = arith.constant 1.000000e+00 : f32
    %22 = vector.broadcast %cst_8 : f32 to vector<16x32xf32>
    %23 = arith.addf %21, %22 : vector<16x32xf32>
    %c0_9 = arith.constant 0 : index
    %c0_10 = arith.constant 0 : index
    %24 = vector.load %arg2[%c0_9, %c0_10] : memref<32x256xf32, #tpu.memory_space<vmem>>, vector<32x192xf32>
    %cst_11 = arith.constant dense<0.000000e+00> : vector<16x192xf32>
    %25 = tpu.matmul %23, %24, %cst_11 {dimension_numbers = #tpu.dot_dimension_numbers<[1], [0], [0], [1], [0, 0, 1, 1], [], []>} : vector<16x32xf32>, vector<32x192xf32>, vector<16x192xf32> -> vector<16x192xf32>
    %c0_12 = arith.constant 0 : index
    %c0_13 = arith.constant 0 : index
    %26 = vector.load %arg3[%c0_12, %c0_13] : memref<1x320xf32, #tpu.memory_space<vmem>>, vector<1x192xf32>
    %27 = vector.broadcast %26 : vector<1x192xf32> to vector<16x192xf32>
    %28 = arith.addf %25, %27 : vector<16x192xf32>
    %cst_14 = arith.constant 0.000000e+00 : f32
    %29 = vector.broadcast %cst_14 : f32 to vector<16x32xf32>
    %30 = vector.extract_strided_slice %28 {offsets = [0, 0], sizes = [16, 8], strides = [1, 1]} : vector<16x192xf32> to vector<16x8xf32>
    %31 = vector.extract_strided_slice %28 {offsets = [0, 32], sizes = [16, 8], strides = [1, 1]} : vector<16x192xf32> to vector<16x8xf32>
    %32 = vector.extract_strided_slice %28 {offsets = [0, 64], sizes = [16, 32], strides = [1, 1]} : vector<16x192xf32> to vector<16x32xf32>
    %cst_15 = arith.constant dense<0.000000e+00> : vector<16x16xf32>
    %33 = tpu.matmul %30, %31, %cst_15 {dimension_numbers = #tpu.dot_dimension_numbers<[1], [1], [0], [0], [0, 0, 1, 0], [], []>} : vector<16x8xf32>, vector<16x8xf32>, vector<16x16xf32> -> vector<16x16xf32>
    %34 = arith.addf %33, %1 : vector<16x16xf32>
    %cst_16 = arith.constant dense<0xFF800000> : vector<16xf32>
    %35 = vector.multi_reduction <maximumf>, %34, %cst_16 [1] : vector<16x16xf32> to vector<16xf32>
    %36 = vector.shape_cast %35 : vector<16xf32> to vector<16x1xf32>
    %37 = vector.broadcast %36 : vector<16x1xf32> to vector<16x16xf32>
    %38 = arith.subf %34, %37 : vector<16x16xf32>
    %39 = math.exp %38 : vector<16x16xf32>
    %cst_17 = arith.constant dense<0.000000e+00> : vector<16xf32>
    %40 = vector.multi_reduction <add>, %39, %cst_17 [1] : vector<16x16xf32> to vector<16xf32>
    %41 = vector.shape_cast %40 : vector<16xf32> to vector<16x1xf32>
    %42 = vector.broadcast %41 : vector<16x1xf32> to vector<16x16xf32>
    %43 = arith.divf %39, %42 : vector<16x16xf32>
    %cst_18 = arith.constant dense<0.000000e+00> : vector<16x32xf32>
    %44 = tpu.matmul %43, %32, %cst_18 {dimension_numbers = #tpu.dot_dimension_numbers<[1], [0], [0], [1], [0, 0, 1, 1], [], []>} : vector<16x16xf32>, vector<16x32xf32>, vector<16x32xf32> -> vector<16x32xf32>
    %45 = arith.addf %29, %44 : vector<16x32xf32>
    %46 = vector.extract_strided_slice %28 {offsets = [0, 8], sizes = [16, 8], strides = [1, 1]} : vector<16x192xf32> to vector<16x8xf32>
    %47 = vector.extract_strided_slice %28 {offsets = [0, 40], sizes = [16, 8], strides = [1, 1]} : vector<16x192xf32> to vector<16x8xf32>
    %48 = vector.extract_strided_slice %28 {offsets = [0, 96], sizes = [16, 32], strides = [1, 1]} : vector<16x192xf32> to vector<16x32xf32>
    %cst_19 = arith.constant dense<0.000000e+00> : vector<16x16xf32>
    %49 = tpu.matmul %46, %47, %cst_19 {dimension_numbers = #tpu.dot_dimension_numbers<[1], [1], [0], [0], [0, 0, 1, 0], [], []>} : vector<16x8xf32>, vector<16x8xf32>, vector<16x16xf32> -> vector<16x16xf32>
    %50 = arith.addf %49, %1 : vector<16x16xf32>
    %cst_20 = arith.constant dense<0xFF800000> : vector<16xf32>
    %51 = vector.multi_reduction <maximumf>, %50, %cst_20 [1] : vector<16x16xf32> to vector<16xf32>
    %52 = vector.shape_cast %51 : vector<16xf32> to vector<16x1xf32>
    %53 = vector.broadcast %52 : vector<16x1xf32> to vector<16x16xf32>
    %54 = arith.subf %50, %53 : vector<16x16xf32>
    %55 = math.exp %54 : vector<16x16xf32>
    %cst_21 = arith.constant dense<0.000000e+00> : vector<16xf32>
    %56 = vector.multi_reduction <add>, %55, %cst_21 [1] : vector<16x16xf32> to vector<16xf32>
    %57 = vector.shape_cast %56 : vector<16xf32> to vector<16x1xf32>
    %58 = vector.broadcast %57 : vector<16x1xf32> to vector<16x16xf32>
    %59 = arith.divf %55, %58 : vector<16x16xf32>
    %cst_22 = arith.constant dense<0.000000e+00> : vector<16x32xf32>
    %60 = tpu.matmul %59, %48, %cst_22 {dimension_numbers = #tpu.dot_dimension_numbers<[1], [0], [0], [1], [0, 0, 1, 1], [], []>} : vector<16x16xf32>, vector<16x32xf32>, vector<16x32xf32> -> vector<16x32xf32>
    %61 = arith.addf %45, %60 : vector<16x32xf32>
    %62 = vector.extract_strided_slice %28 {offsets = [0, 16], sizes = [16, 8], strides = [1, 1]} : vector<16x192xf32> to vector<16x8xf32>
    %63 = vector.extract_strided_slice %28 {offsets = [0, 48], sizes = [16, 8], strides = [1, 1]} : vector<16x192xf32> to vector<16x8xf32>
    %64 = vector.extract_strided_slice %28 {offsets = [0, 128], sizes = [16, 32], strides = [1, 1]} : vector<16x192xf32> to vector<16x32xf32>
    %cst_23 = arith.constant dense<0.000000e+00> : vector<16x16xf32>
    %65 = tpu.matmul %62, %63, %cst_23 {dimension_numbers = #tpu.dot_dimension_numbers<[1], [1], [0], [0], [0, 0, 1, 0], [], []>} : vector<16x8xf32>, vector<16x8xf32>, vector<16x16xf32> -> vector<16x16xf32>
    %66 = arith.addf %65, %1 : vector<16x16xf32>
    %cst_24 = arith.constant dense<0xFF800000> : vector<16xf32>
    %67 = vector.multi_reduction <maximumf>, %66, %cst_24 [1] : vector<16x16xf32> to vector<16xf32>
    %68 = vector.shape_cast %67 : vector<16xf32> to vector<16x1xf32>
    %69 = vector.broadcast %68 : vector<16x1xf32> to vector<16x16xf32>
    %70 = arith.subf %66, %69 : vector<16x16xf32>
    %71 = math.exp %70 : vector<16x16xf32>
    %cst_25 = arith.constant dense<0.000000e+00> : vector<16xf32>
    %72 = vector.multi_reduction <add>, %71, %cst_25 [1] : vector<16x16xf32> to vector<16xf32>
    %73 = vector.shape_cast %72 : vector<16xf32> to vector<16x1xf32>
    %74 = vector.broadcast %73 : vector<16x1xf32> to vector<16x16xf32>
    %75 = arith.divf %71, %74 : vector<16x16xf32>
    %cst_26 = arith.constant dense<0.000000e+00> : vector<16x32xf32>
    %76 = tpu.matmul %75, %64, %cst_26 {dimension_numbers = #tpu.dot_dimension_numbers<[1], [0], [0], [1], [0, 0, 1, 1], [], []>} : vector<16x16xf32>, vector<16x32xf32>, vector<16x32xf32> -> vector<16x32xf32>
    %77 = arith.addf %61, %76 : vector<16x32xf32>
    %78 = vector.extract_strided_slice %28 {offsets = [0, 24], sizes = [16, 8], strides = [1, 1]} : vector<16x192xf32> to vector<16x8xf32>
    %79 = vector.extract_strided_slice %28 {offsets = [0, 56], sizes = [16, 8], strides = [1, 1]} : vector<16x192xf32> to vector<16x8xf32>
    %80 = vector.extract_strided_slice %28 {offsets = [0, 160], sizes = [16, 32], strides = [1, 1]} : vector<16x192xf32> to vector<16x32xf32>
    %cst_27 = arith.constant dense<0.000000e+00> : vector<16x16xf32>
    %81 = tpu.matmul %78, %79, %cst_27 {dimension_numbers = #tpu.dot_dimension_numbers<[1], [1], [0], [0], [0, 0, 1, 0], [], []>} : vector<16x8xf32>, vector<16x8xf32>, vector<16x16xf32> -> vector<16x16xf32>
    %82 = arith.addf %81, %1 : vector<16x16xf32>
    %cst_28 = arith.constant dense<0xFF800000> : vector<16xf32>
    %83 = vector.multi_reduction <maximumf>, %82, %cst_28 [1] : vector<16x16xf32> to vector<16xf32>
    %84 = vector.shape_cast %83 : vector<16xf32> to vector<16x1xf32>
    %85 = vector.broadcast %84 : vector<16x1xf32> to vector<16x16xf32>
    %86 = arith.subf %82, %85 : vector<16x16xf32>
    %87 = math.exp %86 : vector<16x16xf32>
    %cst_29 = arith.constant dense<0.000000e+00> : vector<16xf32>
    %88 = vector.multi_reduction <add>, %87, %cst_29 [1] : vector<16x16xf32> to vector<16xf32>
    %89 = vector.shape_cast %88 : vector<16xf32> to vector<16x1xf32>
    %90 = vector.broadcast %89 : vector<16x1xf32> to vector<16x16xf32>
    %91 = arith.divf %87, %90 : vector<16x16xf32>
    %cst_30 = arith.constant dense<0.000000e+00> : vector<16x32xf32>
    %92 = tpu.matmul %91, %80, %cst_30 {dimension_numbers = #tpu.dot_dimension_numbers<[1], [0], [0], [1], [0, 0, 1, 1], [], []>} : vector<16x16xf32>, vector<16x32xf32>, vector<16x32xf32> -> vector<16x32xf32>
    %93 = arith.addf %77, %92 : vector<16x32xf32>
    %94 = arith.addf %0, %93 : vector<16x32xf32>
    %c0_31 = arith.constant 0 : index
    %c192 = arith.constant 192 : index
    %95 = vector.load %arg3[%c0_31, %c192] : memref<1x320xf32, #tpu.memory_space<vmem>>, vector<1x32xf32>
    %96 = vector.broadcast %95 : vector<1x32xf32> to vector<16x32xf32>
    %97 = arith.addf %94, %96 : vector<16x32xf32>
    %cst_32 = arith.constant dense<0.000000e+00> : vector<16xf32>
    %98 = vector.multi_reduction <add>, %97, %cst_32 [1] : vector<16x32xf32> to vector<16xf32>
    %99 = vector.shape_cast %98 : vector<16xf32> to vector<16x1xf32>
    %cst_33 = arith.constant 3.200000e+01 : f32
    %100 = vector.broadcast %cst_33 : f32 to vector<16x1xf32>
    %101 = arith.divf %99, %100 : vector<16x1xf32>
    %102 = vector.broadcast %101 : vector<16x1xf32> to vector<16x32xf32>
    %103 = arith.subf %97, %102 : vector<16x32xf32>
    %104 = arith.mulf %103, %103 : vector<16x32xf32>
    %cst_34 = arith.constant dense<0.000000e+00> : vector<16xf32>
    %105 = vector.multi_reduction <add>, %104, %cst_34 [1] : vector<16x32xf32> to vector<16xf32>
    %106 = vector.shape_cast %105 : vector<16xf32> to vector<16x1xf32>
    %cst_35 = arith.constant 3.100000e+01 : f32
    %107 = vector.broadcast %cst_35 : f32 to vector<16x1xf32>
    %108 = arith.divf %106, %107 : vector<16x1xf32>
    %109 = math.sqrt %108 : vector<16x1xf32>
    %110 = vector.broadcast %101 : vector<16x1xf32> to vector<16x32xf32>
    %111 = arith.subf %97, %110 : vector<16x32xf32>
    %cst_36 = arith.constant 1.000000e+00 : f32
    %112 = vector.broadcast %cst_36 : f32 to vector<16x32xf32>
    %113 = arith.mulf %112, %111 : vector<16x32xf32>
    %cst_37 = arith.constant 9.99999997E-7 : f32
    %114 = vector.broadcast %cst_37 : f32 to vector<16x1xf32>
    %115 = arith.addf %109, %114 : vector<16x1xf32>
    %116 = vector.broadcast %115 : vector<16x1xf32> to vector<16x32xf32>
    %117 = arith.divf %113, %116 : vector<16x32xf32>
    %cst_38 = arith.constant 1.000000e+00 : f32
    %118 = vector.broadcast %cst_38 : f32 to vector<16x32xf32>
    %119 = arith.addf %117, %118 : vector<16x32xf32>
    %c0_39 = arith.constant 0 : index
    %c192_40 = arith.constant 192 : index
    %120 = vector.load %arg2[%c0_39, %c192_40] : memref<32x256xf32, #tpu.memory_space<vmem>>, vector<32x64xf32>
    %cst_41 = arith.constant dense<0.000000e+00> : vector<16x64xf32>
    %121 = tpu.matmul %119, %120, %cst_41 {dimension_numbers = #tpu.dot_dimension_numbers<[1], [0], [0], [1], [0, 0, 1, 1], [], []>} : vector<16x32xf32>, vector<32x64xf32>, vector<16x64xf32> -> vector<16x64xf32>
    %c0_42 = arith.constant 0 : index
    %c224 = arith.constant 224 : index
    %122 = vector.load %arg3[%c0_42, %c224] : memref<1x320xf32, #tpu.memory_space<vmem>>, vector<1x64xf32>
    %123 = vector.broadcast %122 : vector<1x64xf32> to vector<16x64xf32>
    %124 = arith.addf %121, %123 : vector<16x64xf32>
    %cst_43 = arith.constant 0.000000e+00 : f32
    %125 = vector.broadcast %cst_43 : f32 to vector<16x64xf32>
    %126 = arith.maximumf %124, %125 : vector<16x64xf32>
    %c0_44 = arith.constant 0 : index
    %c0_45 = arith.constant 0 : index
    %127 = vector.load %arg4[%c0_44, %c0_45] : memref<64x32xf32, #tpu.memory_space<vmem>>, vector<64x32xf32>
    %cst_46 = arith.constant dense<0.000000e+00> : vector<16x32xf32>
    %128 = tpu.matmul %126, %127, %cst_46 {dimension_numbers = #tpu.dot_dimension_numbers<[1], [0], [0], [1], [0, 0, 1, 1], [], []>} : vector<16x64xf32>, vector<64x32xf32>, vector<16x32xf32> -> vector<16x32xf32>
    %c0_47 = arith.constant 0 : index
    %c288 = arith.constant 288 : index
    %129 = vector.load %arg3[%c0_47, %c288] : memref<1x320xf32, #tpu.memory_space<vmem>>, vector<1x32xf32>
    %130 = vector.broadcast %129 : vector<1x32xf32> to vector<16x32xf32>
    %131 = arith.addf %128, %130 : vector<16x32xf32>
    %132 = arith.addf %97, %131 : vector<16x32xf32>
    %c0_48 = arith.constant 0 : index
    %c0_49 = arith.constant 0 : index
    %133 = vector.load %arg5[%c0_48, %c0_49] : memref<16x32xf32, #tpu.memory_space<vmem>>, vector<16x32xf32>
    tpu.vector_store %arg5[%c0_48, %c0_49], %132 {strides = array<i32>} : memref<16x32xf32, #tpu.memory_space<vmem>>, vector<16x32xf32>,
    return
  }
}

</mosaic_0001>

<llo_original>
// kernel: tpu_custom_call.1
$region0: #{tpu_custom_call.1}
  #allocation0 [shape = 'u32[]', space=smem, size = 0x4, offset = 0x4, fixed_abs, tag = 'smem constant byte address 0x4 - core index']
  #allocation1 [shape = 'u32[144,128]{1,0:T(1,128)}', space=vmem, size = 0x12000, scoped, tag = 'internal scratch']
  %s0 = inlined_call_operand.vmem [shape: f32[16,32], index: 0, kind: input, shape index: {}]
  %s1 = inlined_call_operand.vmem [shape: f32[16,16], index: 1, kind: input, shape index: {}]
  %s2 = inlined_call_operand.vmem [shape: f32[32,256], index: 2, kind: input, shape index: {}]
  %s3 = inlined_call_operand.vmem [shape: f32[1,320], index: 3, kind: input, shape index: {}]
  %s4 = inlined_call_operand.vmem [shape: f32[64,32], index: 4, kind: input, shape index: {}]
  %s5 = inlined_call_operand.hbm [shape: f32[16,32], index: 5, kind: output, shape index: {}]
  %s6 = sld [smem:[#allocation0]]
  $region30: #{tpu_custom_call.1} parent=0
    _
  %s8 = ssub.s32 1, %s6
  %s9 = scalar_select 0, %s8, %s6
  $region1: #{tpu_custom_call.1} parent=0
    #allocation2 [shape = 'u8[8192]{0}', space=vmem, size = 0x2000, scoped, tag = 'output window, operand 0, single buffered']
    #allocation3 [shape = 's32[1]{0}', space=sflag, size = 0x4, scoped, tag = 'scoped memory for tpu_custom_call.1']
    %10 = vsyncpa [#allocation3], 0
    // Predicated region
    $region2: #{tpu_custom_call.1} parent=1 // pred_check
      _
    $region3: #{tpu_custom_call.1} parent=1 // pred_check_branch
      %12 = sbr.rel (0) target = $region5
    $region4: #{tpu_custom_call.1} parent=1 // pred_region
      _
    $region5: #{tpu_custom_call.1} parent=1 // pred_fallthru
      _
    // Predicated region
    $region6: #{tpu_custom_call.1} parent=1 // pred_check
      _
    $region7: #{tpu_custom_call.1} parent=1 // pred_check_branch
      %14 = sbr.rel (0) target = $region9
    $region8: #{tpu_custom_call.1} parent=1 // pred_region
      _
    $region9: #{tpu_custom_call.1} parent=1 // pred_fallthru
      _
    // Predicated region
    $region10: #{tpu_custom_call.1} parent=1 // pred_check
      _
    $region11: #{tpu_custom_call.1} parent=1 // pred_check_branch
      %16 = sbr.rel (0) target = $region13
    $region12: #{tpu_custom_call.1} parent=1 // pred_region
      _
    $region13: #{tpu_custom_call.1} parent=1 // pred_fallthru
      _
    // Predicated region
    $region14: #{tpu_custom_call.1} parent=1 // pred_check
      _
    $region15: #{tpu_custom_call.1} parent=1 // pred_check_branch
      %18 = sbr.rel (0) target = $region17
    $region16: #{tpu_custom_call.1} parent=1 // pred_region
      _
    $region17: #{tpu_custom_call.1} parent=1 // pred_fallthru
      _
    // Predicated region
    $region18: #{tpu_custom_call.1} parent=1 // pred_check
      _
    $region19: #{tpu_custom_call.1} parent=1 // pred_check_branch
      %20 = sbr.rel (0) target = $region21
    $region20: #{tpu_custom_call.1} parent=1 // pred_region
      _
    $region21: #{tpu_custom_call.1} parent=1 // pred_fallthru
      _
    %v21 = vld [vmem:[%s0] sm:$0xff]
    %v22 = vld [vmem:[%s0 + $0x8] sm:$0xff]
    %v23 = vld [vmem:[%s1] sm:$0xff]
    %v24 = vld [vmem:[%s1 + $0x8] sm:$0xff]
    %vm25 = vcmask 261120
    %v26 = vsel %vm25, %v21, 0.0
    %27 = vadd.xlane.f32.xlu0 %v26
    %v28 = vpop.xlane.xlu0 %27
    %v29 = vsel %vm25, %v22, 0.0
    %30 = vadd.xlane.f32.xlu0 %v29
    %v31 = vpop.xlane.xlu0 %30
    %v32 = vrcp.pop 32.0
    %v33 = vmul.f32 %v28, %v32
    %v34 = vmul.f32 %v31, %v32
    %v35 = vsub.f32 %v21, %v33
    %v36 = vsub.f32 %v22, %v34
    %v37 = vmul.f32 %v35, %v35
    %v38 = vmul.f32 %v36, %v36
    %v39 = vsel %vm25, %v37, 0.0
    %40 = vadd.xlane.f32.xlu0 %v39
    %v41 = vpop.xlane.xlu0 %40
    %v42 = vsel %vm25, %v38, 0.0
    %43 = vadd.xlane.f32.xlu0 %v42
    %v44 = vpop.xlane.xlu0 %43
    %v45 = vrcp.pop 31.0
    %v46 = vmul.f32 %v41, %v45
    %v47 = vmul.f32 %v44, %v45
    %v48 = vrsqrt.pop %v46
    %v49 = vmul.f32 %v46, %v48
    %vm50 = vcmp.eq.f32.partialorder %v46, inf
    %v51 = vsel %vm50, %v46, %v49
    %vm52 = vcmp.eq.f32.partialorder %v46, 0.0
    %v53 = vand.u32 %v46, 2147483648
    %v54 = vsel %vm52, %v53, %v51
    %v55 = vrsqrt.pop %v47
    %v56 = vmul.f32 %v47, %v55
    %vm57 = vcmp.eq.f32.partialorder %v47, inf
    %v58 = vsel %vm57, %v47, %v56
    %vm59 = vcmp.eq.f32.partialorder %v47, 0.0
    %v60 = vand.u32 %v47, 2147483648
    %v61 = vsel %vm59, %v60, %v58
    %v62 = vadd.f32 %v54, 1e-06
    %v63 = vadd.f32 %v61, 1e-06
    %v64 = vrcp.pop %v62
    %v65 = vmul.f32 %v35, %v64
    %v66 = vrcp.pop %v63
    %v67 = vmul.f32 %v36, %v66
    %v68 = vadd.f32 %v65, 1.0
    %v69 = vadd.f32 %v67, 1.0
    %v70 = vld [vmem:[%s2] sm:$0xff]
    %v71 = vld [vmem:[%s2 + $0x8] sm:$0xff]
    %v72 = vld [vmem:[%s2 + $0x10] sm:$0xff]
    %v73 = vld [vmem:[%s2 + $0x18] sm:$0xff]
    %v74 = vld [vmem:[%s2 + $0x20] sm:$0xff]
    %v75 = vld [vmem:[%s2 + $0x28] sm:$0xff]
    %v76 = vld [vmem:[%s2 + $0x30] sm:$0xff]
    %v77 = vld [vmem:[%s2 + $0x38] sm:$0xff]
    %v78 = vld [vmem:[%s3] sm:$0x3]
    %v80 = vlaneseq
    %v81 = vshrl.u32 %v80, 7
    %v82 = vsub.s32 0, %v81
    %v83 = vrot.slane %v78, %v82
    %v84 = vlaneseq
    %v85 = vshrl.u32 %v84, 7
    %v86 = vsub.s32 1, %v85
    %v87 = vrot.slane %v78, %v86
    %v91 = vsel %vm25, %v68, 0
    %v94 = vsel %vm25, %v69, 0
    %96 = vmatprep.subr.mxu0 %v71
    %97 = vmatpush1.msra.mxu0 %v70
    %98 = vmatprep.subr.mxu0 %v73
    %99 = vmatpush1.msra.mxu0 %v72
    %100 = vmatprep.subr.mxu0 %v75
    %101 = vmatpush1.msra.mxu0 %v74
    %102 = vmatprep.subr.mxu0 %v77
    %103 = vmatpush1.msra.mxu0 %v76
    %104 = vmatprep.subr.mxu0 0.0
    %105 = vmatpush1.msra.mxu0 0.0
    %106 = vmatprep.subr.mxu0 0.0
    %107 = vmatpush1.msra.mxu0 0.0
    %108 = vmatprep.subr.mxu0 0.0
    %109 = vmatpush1.msra.mxu0 0.0
    %110 = vmatprep.subr.mxu0 0.0
    %111 = vmatpush1.msra.mxu0 0.0
    %112 = vmatprep.subr.mxu0 0.0
    %113 = vmatpush1.msra.mxu0 0.0
    %114 = vmatprep.subr.mxu0 0.0
    %115 = vmatpush1.msra.mxu0 0.0
    %116 = vmatprep.subr.mxu0 0.0
    %117 = vmatpush1.msra.mxu0 0.0
    %118 = vmatprep.subr.mxu0 0.0
    %119 = vmatpush1.msra.mxu0 0.0
    %120 = vmatprep.subr.mxu0 0.0
    %121 = vmatpush1.msra.mxu0 0.0
    %122 = vmatprep.subr.mxu0 0.0
    %123 = vmatpush1.msra.mxu0 0.0
    %124 = vmatprep.subr.mxu0 0.0
    %125 = vmatpush1.msra.mxu0 0.0
    %126 = vmatprep.subr.mxu0 0.0
    %127 = vmatpush1.msra.mxu0 0.0
    %128 = vmatprep.subr.mxu0 0.0
    %129 = vmatpush1.msra.mxu0 0.0
    %130 = vmatprep.subr.mxu0 0.0
    %131 = vmatpush1.msra.mxu0 0.0
    %132 = vmatprep.subr.mxu0 0.0
    %133 = vmatpush1.msra.mxu0 0.0
    %134 = vmatprep.subr.mxu0 0.0
    %135 = vmatpush1.msra.mxu0 0.0
    %136 = vmatprep.subr.mxu0 0.0
    %137 = vmatpush1.msra.mxu0 0.0
    %138 = vmatprep.subr.mxu0 0.0
    %139 = vmatpush1.msra.mxu0 0.0
    %140 = vmatprep.subr.mxu0 0.0
    %141 = vmatpush1.msra.mxu0 0.0
    %142 = vmatprep.subr.mxu0 0.0
    %143 = vmatpush1.msra.mxu0 0.0
    %144 = vmatprep.subr.mxu0 0.0
    %145 = vmatpush1.msra.mxu0 0.0
    %146 = vmatprep.subr.mxu0 0.0
    %147 = vmatpush1.msra.mxu0 0.0
    %148 = vmatprep.subr.mxu0 0.0
    %149 = vmatpush1.msra.mxu0 0.0
    %150 = vmatprep.subr.mxu0 0.0
    %151 = vmatpush1.msra.mxu0 0.0
    %152 = vmatprep.subr.mxu0 0.0
    %153 = vmatpush1.msra.mxu0 0.0
    %154 = vmatprep.subr.mxu0 0.0
    %155 = vmatpush1.msra.mxu0 0.0
    %156 = vmatprep.subr.mxu0 0.0
    %157 = vmatpush1.msra.mxu0 0.0
    %158 = vmatprep.subr.mxu0 0.0
    %159 = vmatpush1.msra.mxu0 0.0
    %160 = vmatprep.mubr.f32.mxu0 0.0
    %161 = vmatmul.mubr.f32.gmra.mrb[0].mxu0 %v91
    %v162 = vpop.f32.mrb[0].mxu0
    %v163 = vadd.f32 %v83, %v162
    %v164 = vpop.f32.mrb[0].mxu0
    %v165 = vadd.f32 %v87, %v164
    %166 = vmatprep.mubr.f32.mxu0 0.0
    %167 = vmatmul.mubr.f32.gmra.mrb[0].mxu0 %v94
    %v168 = vpop.f32.mrb[0].mxu0
    %v169 = vadd.f32 %v83, %v168
    %v170 = vpop.f32.mrb[0].mxu0
    %v171 = vadd.f32 %v87, %v170
    %172 = vdwg.mxu0
    %175 = vrot.lane.b32.xlu0 %v163, 96
    %v176 = vpop.permute.xlu0 %175
    %177 = vrot.lane.b32.xlu0 %v169, 96
    %v178 = vpop.permute.xlu0 %177
    %vm179 = vcmask 64512
    %v180 = vsel %vm179, %v163, 0
    %v182 = vsel %vm179, %v169, 0
    %v184 = vsel %vm179, %v176, 0
    %v186 = vsel %vm179, %v178, 0
    %188 = vmatprep.subr.mxu0 0.0
    %189 = vmatpush1.xpose.msra.mxu0 %v184
    %190 = vmatprep.subr.mxu0 0.0
    %191 = vmatpush1.xpose.msra.mxu0 %v186
    %192 = vmatprep.subr.mxu0 0.0
    %193 = vmatpush1.xpose.msra.mxu0 0.0
    %194 = vmatprep.subr.mxu0 0.0
    %195 = vmatpush1.xpose.msra.mxu0 0.0
    %196 = vmatprep.subr.mxu0 0.0
    %197 = vmatpush1.xpose.msra.mxu0 0.0
    %198 = vmatprep.subr.mxu0 0.0
    %199 = vmatpush1.xpose.msra.mxu0 0.0
    %200 = vmatprep.subr.mxu0 0.0
    %201 = vmatpush1.xpose.msra.mxu0 0.0
    %202 = vmatprep.subr.mxu0 0.0
    %203 = vmatpush1.xpose.msra.mxu0 0.0
    %204 = vmatprep.subr.mxu0 0.0
    %205 = vmatpush1.xpose.msra.mxu0 0.0
    %206 = vmatprep.subr.mxu0 0.0
    %207 = vmatpush1.xpose.msra.mxu0 0.0
    %208 = vmatprep.subr.mxu0 0.0
    %209 = vmatpush1.xpose.msra.mxu0 0.0
    %210 = vmatprep.subr.mxu0 0.0
    %211 = vmatpush1.xpose.msra.mxu0 0.0
    %212 = vmatprep.subr.mxu0 0.0
    %213 = vmatpush1.xpose.msra.mxu0 0.0
    %214 = vmatprep.subr.mxu0 0.0
    %215 = vmatpush1.xpose.msra.mxu0 0.0
    %216 = vmatprep.subr.mxu0 0.0
    %217 = vmatpush1.xpose.msra.mxu0 0.0
    %218 = vmatprep.subr.mxu0 0.0
    %219 = vmatpush1.xpose.msra.mxu0 0.0
    %220 = vmatprep.subr.mxu0 0.0
    %221 = vmatpush1.xpose.msra.mxu0 0.0
    %222 = vmatprep.subr.mxu0 0.0
    %223 = vmatpush1.xpose.msra.mxu0 0.0
    %224 = vmatprep.subr.mxu0 0.0
    %225 = vmatpush1.xpose.msra.mxu0 0.0
    %226 = vmatprep.subr.mxu0 0.0
    %227 = vmatpush1.xpose.msra.mxu0 0.0
    %228 = vmatprep.subr.mxu0 0.0
    %229 = vmatpush1.xpose.msra.mxu0 0.0
    %230 = vmatprep.subr.mxu0 0.0
    %231 = vmatpush1.xpose.msra.mxu0 0.0
    %232 = vmatprep.subr.mxu0 0.0
    %233 = vmatpush1.xpose.msra.mxu0 0.0
    %234 = vmatprep.subr.mxu0 0.0
    %235 = vmatpush1.xpose.msra.mxu0 0.0
    %236 = vmatprep.subr.mxu0 0.0
    %237 = vmatpush1.xpose.msra.mxu0 0.0
    %238 = vmatprep.subr.mxu0 0.0
    %239 = vmatpush1.xpose.msra.mxu0 0.0
    %240 = vmatprep.subr.mxu0 0.0
    %241 = vmatpush1.xpose.msra.mxu0 0.0
    %242 = vmatprep.subr.mxu0 0.0
    %243 = vmatpush1.xpose.msra.mxu0 0.0
    %244 = vmatprep.subr.mxu0 0.0
    %245 = vmatpush1.xpose.msra.mxu0 0.0
    %246 = vmatprep.subr.mxu0 0.0
    %247 = vmatpush1.xpose.msra.mxu0 0.0
    %248 = vmatprep.subr.mxu0 0.0
    %249 = vmatpush1.xpose.msra.mxu0 0.0
    %250 = vmatprep.subr.mxu0 0.0
    %251 = vmatpush1.xpose.msra.mxu0 0.0
    %252 = vmatprep.mubr.f32.mxu0 0.0
    %253 = vmatmul.mubr.f32.gmra.mrb[0].mxu0 %v180
    %v254 = vpop.f32.mrb[0].mxu0
    %v255 = vadd.f32 %v23, %v254
    %v256 = vpop.f32.mrb[0].mxu0
    %257 = vmatprep.mubr.f32.mxu0 0.0
    %258 = vmatmul.mubr.f32.gmra.mrb[0].mxu0 %v182
    %v259 = vpop.f32.mrb[0].mxu0
    %v260 = vadd.f32 %v24, %v259
    %v261 = vpop.f32.mrb[0].mxu0
    %262 = vdwg.mxu0
    %vm263 = vcmask 130048
    %v264 = vsel %vm263, %v255, -inf
    %265 = vmax.xlane.f32.xlu0 %v264
    %v266 = vpop.xlane.xlu0 %265
    %v267 = vsel %vm263, %v260, -inf
    %268 = vmax.xlane.f32.xlu0 %v267
    %v269 = vpop.xlane.xlu0 %268
    %v270 = vsub.f32 %v255, %v266
    %v271 = vsub.f32 %v260, %v269
    %v272 = vmul.f32 %v270, 1.442695
    %v273 = vpow.pop %v272
    %v274 = vmul.f32 %v271, 1.442695
    %v275 = vpow.pop %v274
    %v276 = vsel %vm263, %v273, 0.0
    %277 = vadd.xlane.f32.xlu0 %v276
    %v278 = vpop.xlane.xlu0 %277
    %v279 = vsel %vm263, %v275, 0.0
    %280 = vadd.xlane.f32.xlu0 %v279
    %v281 = vpop.xlane.xlu0 %280
    %v282 = vrcp.pop %v278
    %v283 = vmul.f32 %v273, %v282
    %v284 = vrcp.pop %v281
    %v285 = vmul.f32 %v275, %v284
    %286 = vrot.lane.b32.xlu0 %v163, 120
    %v287 = vpop.permute.xlu0 %286
    %288 = vrot.lane.b32.xlu0 %v169, 120
    %v289 = vpop.permute.xlu0 %288
    %290 = vrot.lane.b32.xlu0 %v163, 88
    %v291 = vpop.permute.xlu0 %290
    %292 = vrot.lane.b32.xlu0 %v169, 88
    %v293 = vpop.permute.xlu0 %292
    %v294 = vsel %vm179, %v287, 0
    %v296 = vsel %vm179, %v289, 0
    %v298 = vsel %vm179, %v291, 0
    %v300 = vsel %vm179, %v293, 0
    %302 = vmatprep.subr.mxu0 0.0
    %303 = vmatpush1.xpose.msra.mxu0 %v298
    %304 = vmatprep.subr.mxu0 0.0
    %305 = vmatpush1.xpose.msra.mxu0 %v300
    %306 = vmatprep.subr.mxu0 0.0
    %307 = vmatpush1.xpose.msra.mxu0 0.0
    %308 = vmatprep.subr.mxu0 0.0
    %309 = vmatpush1.xpose.msra.mxu0 0.0
    %310 = vmatprep.subr.mxu0 0.0
    %311 = vmatpush1.xpose.msra.mxu0 0.0
    %312 = vmatprep.subr.mxu0 0.0
    %313 = vmatpush1.xpose.msra.mxu0 0.0
    %314 = vmatprep.subr.mxu0 0.0
    %315 = vmatpush1.xpose.msra.mxu0 0.0
    %316 = vmatprep.subr.mxu0 0.0
    %317 = vmatpush1.xpose.msra.mxu0 0.0
    %318 = vmatprep.subr.mxu0 0.0
    %319 = vmatpush1.xpose.msra.mxu0 0.0
    %320 = vmatprep.subr.mxu0 0.0
    %321 = vmatpush1.xpose.msra.mxu0 0.0
    %322 = vmatprep.subr.mxu0 0.0
    %323 = vmatpush1.xpose.msra.mxu0 0.0
    %324 = vmatprep.subr.mxu0 0.0
    %325 = vmatpush1.xpose.msra.mxu0 0.0
    %326 = vmatprep.subr.mxu0 0.0
    %327 = vmatpush1.xpose.msra.mxu0 0.0
    %328 = vmatprep.subr.mxu0 0.0
    %329 = vmatpush1.xpose.msra.mxu0 0.0
    %330 = vmatprep.subr.mxu0 0.0
    %331 = vmatpush1.xpose.msra.mxu0 0.0
    %332 = vmatprep.subr.mxu0 0.0
    %333 = vmatpush1.xpose.msra.mxu0 0.0
    %334 = vmatprep.subr.mxu0 0.0
    %335 = vmatpush1.xpose.msra.mxu0 0.0
    %336 = vmatprep.subr.mxu0 0.0
    %337 = vmatpush1.xpose.msra.mxu0 0.0
    %338 = vmatprep.subr.mxu0 0.0
    %339 = vmatpush1.xpose.msra.mxu0 0.0
    %340 = vmatprep.subr.mxu0 0.0
    %341 = vmatpush1.xpose.msra.mxu0 0.0
    %342 = vmatprep.subr.mxu0 0.0
    %343 = vmatpush1.xpose.msra.mxu0 0.0
    %344 = vmatprep.subr.mxu0 0.0
    %345 = vmatpush1.xpose.msra.mxu0 0.0
    %346 = vmatprep.subr.mxu0 0.0
    %347 = vmatpush1.xpose.msra.mxu0 0.0
    %348 = vmatprep.subr.mxu0 0.0
    %349 = vmatpush1.xpose.msra.mxu0 0.0
    %350 = vmatprep.subr.mxu0 0.0
    %351 = vmatpush1.xpose.msra.mxu0 0.0
    %352 = vmatprep.subr.mxu0 0.0
    %353 = vmatpush1.xpose.msra.mxu0 0.0
    %354 = vmatprep.subr.mxu0 0.0
    %355 = vmatpush1.xpose.msra.mxu0 0.0
    %356 = vmatprep.subr.mxu0 0.0
    %357 = vmatpush1.xpose.msra.mxu0 0.0
    %358 = vmatprep.subr.mxu0 0.0
    %359 = vmatpush1.xpose.msra.mxu0 0.0
    %360 = vmatprep.subr.mxu0 0.0
    %361 = vmatpush1.xpose.msra.mxu0 0.0
    %362 = vmatprep.subr.mxu0 0.0
    %363 = vmatpush1.xpose.msra.mxu0 0.0
    %364 = vmatprep.subr.mxu0 0.0
    %365 = vmatpush1.xpose.msra.mxu0 0.0
    %366 = vmatprep.mubr.f32.mxu0 0.0
    %367 = vmatmul.mubr.f32.gmra.mrb[0].mxu0 %v294
    %v368 = vpop.f32.mrb[0].mxu0
    %v369 = vadd.f32 %v23, %v368
    %v370 = vpop.f32.mrb[0].mxu0
    %371 = vmatprep.mubr.f32.mxu0 0.0
    %372 = vmatmul.mubr.f32.gmra.mrb[0].mxu0 %v296
    %v373 = vpop.f32.mrb[0].mxu0
    %v374 = vadd.f32 %v24, %v373
    %v375 = vpop.f32.mrb[0].mxu0
    %376 = vdwg.mxu0
    %v377 = vsel %vm263, %v369, -inf
    %378 = vmax.xlane.f32.xlu0 %v377
    %v379 = vpop.xlane.xlu0 %378
    %v380 = vsel %vm263, %v374, -inf
    %381 = vmax.xlane.f32.xlu0 %v380
    %v382 = vpop.xlane.xlu0 %381
    %v383 = vsub.f32 %v369, %v379
    %v384 = vsub.f32 %v374, %v382
    %v385 = vmul.f32 %v383, 1.442695
    %v386 = vpow.pop %v385
    %v387 = vmul.f32 %v384, 1.442695
    %v388 = vpow.pop %v387
    %v389 = vsel %vm263, %v386, 0.0
    %390 = vadd.xlane.f32.xlu0 %v389
    %v391 = vpop.xlane.xlu0 %390
    %v392 = vsel %vm263, %v388, 0.0
    %393 = vadd.xlane.f32.xlu0 %v392
    %v394 = vpop.xlane.xlu0 %393
    %v395 = vrcp.pop %v391
    %v396 = vmul.f32 %v386, %v395
    %v397 = vrcp.pop %v394
    %v398 = vmul.f32 %v388, %v397
    %399 = vrot.lane.b32.xlu0 %v163, 32
    %v400 = vpop.permute.xlu0 %399
    %401 = vrot.lane.b32.xlu0 %v169, 32
    %v402 = vpop.permute.xlu0 %401
    %v406 = vsel %vm263, %v396, 0
    %v409 = vsel %vm263, %v398, 0
    %411 = vmatprep.subr.mxu0 0.0
    %412 = vmatpush1.msra.mxu0 %v400
    %413 = vmatprep.subr.mxu0 0.0
    %414 = vmatpush1.msra.mxu0 %v402
    %415 = vmatprep.subr.mxu0 0.0
    %416 = vmatpush1.msra.mxu0 0.0
    %417 = vmatprep.subr.mxu0 0.0
    %418 = vmatpush1.msra.mxu0 0.0
    %419 = vmatprep.subr.mxu0 0.0
    %420 = vmatpush1.msra.mxu0 0.0
    %421 = vmatprep.subr.mxu0 0.0
    %422 = vmatpush1.msra.mxu0 0.0
    %423 = vmatprep.subr.mxu0 0.0
    %424 = vmatpush1.msra.mxu0 0.0
    %425 = vmatprep.subr.mxu0 0.0
    %426 = vmatpush1.msra.mxu0 0.0
    %427 = vmatprep.subr.mxu0 0.0
    %428 = vmatpush1.msra.mxu0 0.0
    %429 = vmatprep.subr.mxu0 0.0
    %430 = vmatpush1.msra.mxu0 0.0
    %431 = vmatprep.subr.mxu0 0.0
    %432 = vmatpush1.msra.mxu0 0.0
    %433 = vmatprep.subr.mxu0 0.0
    %434 = vmatpush1.msra.mxu0 0.0
    %435 = vmatprep.subr.mxu0 0.0
    %436 = vmatpush1.msra.mxu0 0.0
    %437 = vmatprep.subr.mxu0 0.0
    %438 = vmatpush1.msra.mxu0 0.0
    %439 = vmatprep.subr.mxu0 0.0
    %440 = vmatpush1.msra.mxu0 0.0
    %441 = vmatprep.subr.mxu0 0.0
    %442 = vmatpush1.msra.mxu0 0.0
    %443 = vmatprep.subr.mxu0 0.0
    %444 = vmatpush1.msra.mxu0 0.0
    %445 = vmatprep.subr.mxu0 0.0
    %446 = vmatpush1.msra.mxu0 0.0
    %447 = vmatprep.subr.mxu0 0.0
    %448 = vmatpush1.msra.mxu0 0.0
    %449 = vmatprep.subr.mxu0 0.0
    %450 = vmatpush1.msra.mxu0 0.0
    %451 = vmatprep.subr.mxu0 0.0
    %452 = vmatpush1.msra.mxu0 0.0
    %453 = vmatprep.subr.mxu0 0.0
    %454 = vmatpush1.msra.mxu0 0.0
    %455 = vmatprep.subr.mxu0 0.0
    %456 = vmatpush1.msra.mxu0 0.0
    %457 = vmatprep.subr.mxu0 0.0
    %458 = vmatpush1.msra.mxu0 0.0
    %459 = vmatprep.subr.mxu0 0.0
    %460 = vmatpush1.msra.mxu0 0.0
    %461 = vmatprep.subr.mxu0 0.0
    %462 = vmatpush1.msra.mxu0 0.0
    %463 = vmatprep.subr.mxu0 0.0
    %464 = vmatpush1.msra.mxu0 0.0
    %465 = vmatprep.subr.mxu0 0.0
    %466 = vmatpush1.msra.mxu0 0.0
    %467 = vmatprep.subr.mxu0 0.0
    %468 = vmatpush1.msra.mxu0 0.0
    %469 = vmatprep.subr.mxu0 0.0
    %470 = vmatpush1.msra.mxu0 0.0
    %471 = vmatprep.subr.mxu0 0.0
    %472 = vmatpush1.msra.mxu0 0.0
    %473 = vmatprep.subr.mxu0 0.0
    %474 = vmatpush1.msra.mxu0 0.0
    %475 = vmatprep.mubr.f32.mxu0 0.0
    %476 = vmatmul.mubr.f32.gmra.mrb[0].mxu0 %v406
    %v477 = vpop.f32.mrb[0].mxu0
    %v478 = vadd.f32 0.0, %v477
    %v479 = vpop.f32.mrb[0].mxu0
    %480 = vmatprep.mubr.f32.mxu0 0.0
    %481 = vmatmul.mubr.f32.gmra.mrb[0].mxu0 %v409
    %v482 = vpop.f32.mrb[0].mxu0
    %v483 = vadd.f32 0.0, %v482
    %v484 = vpop.f32.mrb[0].mxu0
    %485 = vdwg.mxu0
    %486 = vrot.lane.b32.xlu0 %v163, 64
    %v487 = vpop.permute.xlu0 %486
    %488 = vrot.lane.b32.xlu0 %v169, 64
    %v489 = vpop.permute.xlu0 %488
    %v493 = vsel %vm263, %v283, 0
    %v496 = vsel %vm263, %v285, 0
    %498 = vmatprep.subr.mxu0 0.0
    %499 = vmatpush1.msra.mxu0 %v487
    %500 = vmatprep.subr.mxu0 0.0
    %501 = vmatpush1.msra.mxu0 %v489
    %502 = vmatprep.subr.mxu0 0.0
    %503 = vmatpush1.msra.mxu0 0.0
    %504 = vmatprep.subr.mxu0 0.0
    %505 = vmatpush1.msra.mxu0 0.0
    %506 = vmatprep.subr.mxu0 0.0
    %507 = vmatpush1.msra.mxu0 0.0
    %508 = vmatprep.subr.mxu0 0.0
    %509 = vmatpush1.msra.mxu0 0.0
    %510 = vmatprep.subr.mxu0 0.0
    %511 = vmatpush1.msra.mxu0 0.0
    %512 = vmatprep.subr.mxu0 0.0
    %513 = vmatpush1.msra.mxu0 0.0
    %514 = vmatprep.subr.mxu0 0.0
    %515 = vmatpush1.msra.mxu0 0.0
    %516 = vmatprep.subr.mxu0 0.0
    %517 = vmatpush1.msra.mxu0 0.0
    %518 = vmatprep.subr.mxu0 0.0
    %519 = vmatpush1.msra.mxu0 0.0
    %520 = vmatprep.subr.mxu0 0.0
    %521 = vmatpush1.msra.mxu0 0.0
    %522 = vmatprep.subr.mxu0 0.0
    %523 = vmatpush1.msra.mxu0 0.0
    %524 = vmatprep.subr.mxu0 0.0
    %525 = vmatpush1.msra.mxu0 0.0
    %526 = vmatprep.subr.mxu0 0.0
    %527 = vmatpush1.msra.mxu0 0.0
    %528 = vmatprep.subr.mxu0 0.0
    %529 = vmatpush1.msra.mxu0 0.0
    %530 = vmatprep.subr.mxu0 0.0
    %531 = vmatpush1.msra.mxu0 0.0
    %532 = vmatprep.subr.mxu0 0.0
    %533 = vmatpush1.msra.mxu0 0.0
    %534 = vmatprep.subr.mxu0 0.0
    %535 = vmatpush1.msra.mxu0 0.0
    %536 = vmatprep.subr.mxu0 0.0
    %537 = vmatpush1.msra.mxu0 0.0
    %538 = vmatprep.subr.mxu0 0.0
    %539 = vmatpush1.msra.mxu0 0.0
    %540 = vmatprep.subr.mxu0 0.0
    %541 = vmatpush1.msra.mxu0 0.0
    %542 = vmatprep.subr.mxu0 0.0
    %543 = vmatpush1.msra.mxu0 0.0
    %544 = vmatprep.subr.mxu0 0.0
    %545 = vmatpush1.msra.mxu0 0.0
    %546 = vmatprep.subr.mxu0 0.0
    %547 = vmatpush1.msra.mxu0 0.0
    %548 = vmatprep.subr.mxu0 0.0
    %549 = vmatpush1.msra.mxu0 0.0
    %550 = vmatprep.subr.mxu0 0.0
    %551 = vmatpush1.msra.mxu0 0.0
    %552 = vmatprep.subr.mxu0 0.0
    %553 = vmatpush1.msra.mxu0 0.0
    %554 = vmatprep.subr.mxu0 0.0
    %555 = vmatpush1.msra.mxu0 0.0
    %556 = vmatprep.subr.mxu0 0.0
    %557 = vmatpush1.msra.mxu0 0.0
    %558 = vmatprep.subr.mxu0 0.0
    %559 = vmatpush1.msra.mxu0 0.0
    %560 = vmatprep.subr.mxu0 0.0
    %561 = vmatpush1.msra.mxu0 0.0
    %562 = vmatprep.mubr.f32.mxu0 0.0
    %563 = vmatmul.mubr.f32.gmra.mrb[0].mxu0 %v493
    %v564 = vpop.f32.mrb[0].mxu0
    %v565 = vadd.f32 %v478, %v564
    %v566 = vpop.f32.mrb[0].mxu0
    %567 = vmatprep.mubr.f32.mxu0 0.0
    %568 = vmatmul.mubr.f32.gmra.mrb[0].mxu0 %v496
    %v569 = vpop.f32.mrb[0].mxu0
    %v570 = vadd.f32 %v483, %v569
    %v571 = vpop.f32.mrb[0].mxu0
    %572 = vdwg.mxu0
    %573 = vrot.lane.b32.xlu0 %v163, 112
    %v574 = vpop.permute.xlu0 %573
    %575 = vrot.lane.b32.xlu0 %v169, 112
    %v576 = vpop.permute.xlu0 %575
    %577 = vrot.lane.b32.xlu0 %v163, 80
    %v578 = vpop.permute.xlu0 %577
    %579 = vrot.lane.b32.xlu0 %v169, 80
    %v580 = vpop.permute.xlu0 %579
    %v581 = vsel %vm179, %v574, 0
    %v583 = vsel %vm179, %v576, 0
    %v585 = vsel %vm179, %v578, 0
    %v587 = vsel %vm179, %v580, 0
    %589 = vmatprep.subr.mxu0 0.0
    %590 = vmatpush1.xpose.msra.mxu0 %v585
    %591 = vmatprep.subr.mxu0 0.0
    %592 = vmatpush1.xpose.msra.mxu0 %v587
    %593 = vmatprep.subr.mxu0 0.0
    %594 = vmatpush1.xpose.msra.mxu0 0.0
    %595 = vmatprep.subr.mxu0 0.0
    %596 = vmatpush1.xpose.msra.mxu0 0.0
    %597 = vmatprep.subr.mxu0 0.0
    %598 = vmatpush1.xpose.msra.mxu0 0.0
    %599 = vmatprep.subr.mxu0 0.0
    %600 = vmatpush1.xpose.msra.mxu0 0.0
    %601 = vmatprep.subr.mxu0 0.0
    %602 = vmatpush1.xpose.msra.mxu0 0.0
    %603 = vmatprep.subr.mxu0 0.0
    %604 = vmatpush1.xpose.msra.mxu0 0.0
    %605 = vmatprep.subr.mxu0 0.0
    %606 = vmatpush1.xpose.msra.mxu0 0.0
    %607 = vmatprep.subr.mxu0 0.0
    %608 = vmatpush1.xpose.msra.mxu0 0.0
    %609 = vmatprep.subr.mxu0 0.0
    %610 = vmatpush1.xpose.msra.mxu0 0.0
    %611 = vmatprep.subr.mxu0 0.0
    %612 = vmatpush1.xpose.msra.mxu0 0.0
    %613 = vmatprep.subr.mxu0 0.0
    %614 = vmatpush1.xpose.msra.mxu0 0.0
    %615 = vmatprep.subr.mxu0 0.0
    %616 = vmatpush1.xpose.msra.mxu0 0.0
    %617 = vmatprep.subr.mxu0 0.0
    %618 = vmatpush1.xpose.msra.mxu0 0.0
    %619 = vmatprep.subr.mxu0 0.0
    %620 = vmatpush1.xpose.msra.mxu0 0.0
    %621 = vmatprep.subr.mxu0 0.0
    %622 = vmatpush1.xpose.msra.mxu0 0.0
    %623 = vmatprep.subr.mxu0 0.0
    %624 = vmatpush1.xpose.msra.mxu0 0.0
    %625 = vmatprep.subr.mxu0 0.0
    %626 = vmatpush1.xpose.msra.mxu0 0.0
    %627 = vmatprep.subr.mxu0 0.0
    %628 = vmatpush1.xpose.msra.mxu0 0.0
    %629 = vmatprep.subr.mxu0 0.0
    %630 = vmatpush1.xpose.msra.mxu0 0.0
    %631 = vmatprep.subr.mxu0 0.0
    %632 = vmatpush1.xpose.msra.mxu0 0.0
    %633 = vmatprep.subr.mxu0 0.0
    %634 = vmatpush1.xpose.msra.mxu0 0.0
    %635 = vmatprep.subr.mxu0 0.0
    %636 = vmatpush1.xpose.msra.mxu0 0.0
    %637 = vmatprep.subr.mxu0 0.0
    %638 = vmatpush1.xpose.msra.mxu0 0.0
    %639 = vmatprep.subr.mxu0 0.0
    %640 = vmatpush1.xpose.msra.mxu0 0.0
    %641 = vmatprep.subr.mxu0 0.0
    %642 = vmatpush1.xpose.msra.mxu0 0.0
    %643 = vmatprep.subr.mxu0 0.0
    %644 = vmatpush1.xpose.msra.mxu0 0.0
    %645 = vmatprep.subr.mxu0 0.0
    %646 = vmatpush1.xpose.msra.mxu0 0.0
    %647 = vmatprep.subr.mxu0 0.0
    %648 = vmatpush1.xpose.msra.mxu0 0.0
    %649 = vmatprep.subr.mxu0 0.0
    %650 = vmatpush1.xpose.msra.mxu0 0.0
    %651 = vmatprep.subr.mxu0 0.0
    %652 = vmatpush1.xpose.msra.mxu0 0.0
    %653 = vmatprep.mubr.f32.mxu0 0.0
    %654 = vmatmul.mubr.f32.gmra.mrb[0].mxu0 %v581
    %v655 = vpop.f32.mrb[0].mxu0
    %v656 = vadd.f32 %v23, %v655
    %v657 = vpop.f32.mrb[0].mxu0
    %658 = vmatprep.mubr.f32.mxu0 0.0
    %659 = vmatmul.mubr.f32.gmra.mrb[0].mxu0 %v583
    %v660 = vpop.f32.mrb[0].mxu0
    %v661 = vadd.f32 %v24, %v660
    %v662 = vpop.f32.mrb[0].mxu0
    %663 = vdwg.mxu0
    %v664 = vsel %vm263, %v656, -inf
    %665 = vmax.xlane.f32.xlu0 %v664
    %v666 = vpop.xlane.xlu0 %665
    %v667 = vsel %vm263, %v661, -inf
    %668 = vmax.xlane.f32.xlu0 %v667
    %v669 = vpop.xlane.xlu0 %668
    %v670 = vsub.f32 %v656, %v666
    %v671 = vsub.f32 %v661, %v669
    %v672 = vmul.f32 %v670, 1.442695
    %v673 = vpow.pop %v672
    %v674 = vmul.f32 %v671, 1.442695
    %v675 = vpow.pop %v674
    %v676 = vsel %vm263, %v673, 0.0
    %677 = vadd.xlane.f32.xlu0 %v676
    %v678 = vpop.xlane.xlu0 %677
    %v679 = vsel %vm263, %v675, 0.0
    %680 = vadd.xlane.f32.xlu0 %v679
    %v681 = vpop.xlane.xlu0 %680
    %v682 = vrcp.pop %v678
    %v683 = vmul.f32 %v673, %v682
    %v684 = vrcp.pop %v681
    %v685 = vmul.f32 %v675, %v684
    %v687 = vsel %vm263, %v683, 0
    %v690 = vsel %vm263, %v685, 0
    %692 = vmatprep.subr.mxu0 0.0
    %693 = vmatpush1.msra.mxu0 %v165
    %694 = vmatprep.subr.mxu0 0.0
    %695 = vmatpush1.msra.mxu0 %v171
    %696 = vmatprep.subr.mxu0 0.0
    %697 = vmatpush1.msra.mxu0 0.0
    %698 = vmatprep.subr.mxu0 0.0
    %699 = vmatpush1.msra.mxu0 0.0
    %700 = vmatprep.subr.mxu0 0.0
    %701 = vmatpush1.msra.mxu0 0.0
    %702 = vmatprep.subr.mxu0 0.0
    %703 = vmatpush1.msra.mxu0 0.0
    %704 = vmatprep.subr.mxu0 0.0
    %705 = vmatpush1.msra.mxu0 0.0
    %706 = vmatprep.subr.mxu0 0.0
    %707 = vmatpush1.msra.mxu0 0.0
    %708 = vmatprep.subr.mxu0 0.0
    %709 = vmatpush1.msra.mxu0 0.0
    %710 = vmatprep.subr.mxu0 0.0
    %711 = vmatpush1.msra.mxu0 0.0
    %712 = vmatprep.subr.mxu0 0.0
    %713 = vmatpush1.msra.mxu0 0.0
    %714 = vmatprep.subr.mxu0 0.0
    %715 = vmatpush1.msra.mxu0 0.0
    %716 = vmatprep.subr.mxu0 0.0
    %717 = vmatpush1.msra.mxu0 0.0
    %718 = vmatprep.subr.mxu0 0.0
    %719 = vmatpush1.msra.mxu0 0.0
    %720 = vmatprep.subr.mxu0 0.0
    %721 = vmatpush1.msra.mxu0 0.0
    %722 = vmatprep.subr.mxu0 0.0
    %723 = vmatpush1.msra.mxu0 0.0
    %724 = vmatprep.subr.mxu0 0.0
    %725 = vmatpush1.msra.mxu0 0.0
    %726 = vmatprep.subr.mxu0 0.0
    %727 = vmatpush1.msra.mxu0 0.0
    %728 = vmatprep.subr.mxu0 0.0
    %729 = vmatpush1.msra.mxu0 0.0
    %730 = vmatprep.subr.mxu0 0.0
    %731 = vmatpush1.msra.mxu0 0.0
    %732 = vmatprep.subr.mxu0 0.0
    %733 = vmatpush1.msra.mxu0 0.0
    %734 = vmatprep.subr.mxu0 0.0
    %735 = vmatpush1.msra.mxu0 0.0
    %736 = vmatprep.subr.mxu0 0.0
    %737 = vmatpush1.msra.mxu0 0.0
    %738 = vmatprep.subr.mxu0 0.0
    %739 = vmatpush1.msra.mxu0 0.0
    %740 = vmatprep.subr.mxu0 0.0
    %741 = vmatpush1.msra.mxu0 0.0
    %742 = vmatprep.subr.mxu0 0.0
    %743 = vmatpush1.msra.mxu0 0.0
    %744 = vmatprep.subr.mxu0 0.0
    %745 = vmatpush1.msra.mxu0 0.0
    %746 = vmatprep.subr.mxu0 0.0
    %747 = vmatpush1.msra.mxu0 0.0
    %748 = vmatprep.subr.mxu0 0.0
    %749 = vmatpush1.msra.mxu0 0.0
    %750 = vmatprep.subr.mxu0 0.0
    %751 = vmatpush1.msra.mxu0 0.0
    %752 = vmatprep.subr.mxu0 0.0
    %753 = vmatpush1.msra.mxu0 0.0
    %754 = vmatprep.subr.mxu0 0.0
    %755 = vmatpush1.msra.mxu0 0.0
    %756 = vmatprep.mubr.f32.mxu0 0.0
    %757 = vmatmul.mubr.f32.gmra.mrb[0].mxu0 %v687
    %v758 = vpop.f32.mrb[0].mxu0
    %v759 = vadd.f32 0.0, %v758
    %v760 = vpop.f32.mrb[0].mxu0
    %761 = vmatprep.mubr.f32.mxu0 0.0
    %762 = vmatmul.mubr.f32.gmra.mrb[0].mxu0 %v690
    %v763 = vpop.f32.mrb[0].mxu0
    %v764 = vadd.f32 0.0, %v763
    %v765 = vpop.f32.mrb[0].mxu0
    %766 = vdwg.mxu0
    %v767 = vadd.f32 %v565, %v759
    %v768 = vadd.f32 %v570, %v764
    %769 = vrot.lane.b32.xlu0 %v163, 104
    %v770 = vpop.permute.xlu0 %769
    %771 = vrot.lane.b32.xlu0 %v169, 104
    %v772 = vpop.permute.xlu0 %771
    %773 = vrot.lane.b32.xlu0 %v163, 72
    %v774 = vpop.permute.xlu0 %773
    %775 = vrot.lane.b32.xlu0 %v169, 72
    %v776 = vpop.permute.xlu0 %775
    %v777 = vsel %vm179, %v770, 0
    %v779 = vsel %vm179, %v772, 0
    %v781 = vsel %vm179, %v774, 0
    %v783 = vsel %vm179, %v776, 0
    %785 = vmatprep.subr.mxu0 0.0
    %786 = vmatpush1.xpose.msra.mxu0 %v781
    %787 = vmatprep.subr.mxu0 0.0
    %788 = vmatpush1.xpose.msra.mxu0 %v783
    %789 = vmatprep.subr.mxu0 0.0
    %790 = vmatpush1.xpose.msra.mxu0 0.0
    %791 = vmatprep.subr.mxu0 0.0
    %792 = vmatpush1.xpose.msra.mxu0 0.0
    %793 = vmatprep.subr.mxu0 0.0
    %794 = vmatpush1.xpose.msra.mxu0 0.0
    %795 = vmatprep.subr.mxu0 0.0
    %796 = vmatpush1.xpose.msra.mxu0 0.0
    %797 = vmatprep.subr.mxu0 0.0
    %798 = vmatpush1.xpose.msra.mxu0 0.0
    %799 = vmatprep.subr.mxu0 0.0
    %800 = vmatpush1.xpose.msra.mxu0 0.0
    %801 = vmatprep.subr.mxu0 0.0
    %802 = vmatpush1.xpose.msra.mxu0 0.0
    %803 = vmatprep.subr.mxu0 0.0
    %804 = vmatpush1.xpose.msra.mxu0 0.0
    %805 = vmatprep.subr.mxu0 0.0
    %806 = vmatpush1.xpose.msra.mxu0 0.0
    %807 = vmatprep.subr.mxu0 0.0
    %808 = vmatpush1.xpose.msra.mxu0 0.0
    %809 = vmatprep.subr.mxu0 0.0
    %810 = vmatpush1.xpose.msra.mxu0 0.0
    %811 = vmatprep.subr.mxu0 0.0
    %812 = vmatpush1.xpose.msra.mxu0 0.0
    %813 = vmatprep.subr.mxu0 0.0
    %814 = vmatpush1.xpose.msra.mxu0 0.0
    %815 = vmatprep.subr.mxu0 0.0
    %816 = vmatpush1.xpose.msra.mxu0 0.0
    %817 = vmatprep.subr.mxu0 0.0
    %818 = vmatpush1.xpose.msra.mxu0 0.0
    %819 = vmatprep.subr.mxu0 0.0
    %820 = vmatpush1.xpose.msra.mxu0 0.0
    %821 = vmatprep.subr.mxu0 0.0
    %822 = vmatpush1.xpose.msra.mxu0 0.0
    %823 = vmatprep.subr.mxu0 0.0
    %824 = vmatpush1.xpose.msra.mxu0 0.0
    %825 = vmatprep.subr.mxu0 0.0
    %826 = vmatpush1.xpose.msra.mxu0 0.0
    %827 = vmatprep.subr.mxu0 0.0
    %828 = vmatpush1.xpose.msra.mxu0 0.0
    %829 = vmatprep.subr.mxu0 0.0
    %830 = vmatpush1.xpose.msra.mxu0 0.0
    %831 = vmatprep.subr.mxu0 0.0
    %832 = vmatpush1.xpose.msra.mxu0 0.0
    %833 = vmatprep.subr.mxu0 0.0
    %834 = vmatpush1.xpose.msra.mxu0 0.0
    %835 = vmatprep.subr.mxu0 0.0
    %836 = vmatpush1.xpose.msra.mxu0 0.0
    %837 = vmatprep.subr.mxu0 0.0
    %838 = vmatpush1.xpose.msra.mxu0 0.0
    %839 = vmatprep.subr.mxu0 0.0
    %840 = vmatpush1.xpose.msra.mxu0 0.0
    %841 = vmatprep.subr.mxu0 0.0
    %842 = vmatpush1.xpose.msra.mxu0 0.0
    %843 = vmatprep.subr.mxu0 0.0
    %844 = vmatpush1.xpose.msra.mxu0 0.0
    %845 = vmatprep.subr.mxu0 0.0
    %846 = vmatpush1.xpose.msra.mxu0 0.0
    %847 = vmatprep.subr.mxu0 0.0
    %848 = vmatpush1.xpose.msra.mxu0 0.0
    %849 = vmatprep.mubr.f32.mxu0 0.0
    %850 = vmatmul.mubr.f32.gmra.mrb[0].mxu0 %v777
    %v851 = vpop.f32.mrb[0].mxu0
    %v852 = vadd.f32 %v23, %v851
    %v853 = vpop.f32.mrb[0].mxu0
    %854 = vmatprep.mubr.f32.mxu0 0.0
    %855 = vmatmul.mubr.f32.gmra.mrb[0].mxu0 %v779
    %v856 = vpop.f32.mrb[0].mxu0
    %v857 = vadd.f32 %v24, %v856
    %v858 = vpop.f32.mrb[0].mxu0
    %859 = vdwg.mxu0
    %v860 = vsel %vm263, %v852, -inf
    %861 = vmax.xlane.f32.xlu0 %v860
    %v862 = vpop.xlane.xlu0 %861
    %v863 = vsel %vm263, %v857, -inf
    %864 = vmax.xlane.f32.xlu0 %v863
    %v865 = vpop.xlane.xlu0 %864
    %v866 = vsub.f32 %v852, %v862
    %v867 = vsub.f32 %v857, %v865
    %v868 = vmul.f32 %v866, 1.442695
    %v869 = vpow.pop %v868
    %v870 = vmul.f32 %v867, 1.442695
    %v871 = vpow.pop %v870
    %v872 = vsel %vm263, %v869, 0.0
    %873 = vadd.xlane.f32.xlu0 %v872
    %v874 = vpop.xlane.xlu0 %873
    %v875 = vsel %vm263, %v871, 0.0
    %876 = vadd.xlane.f32.xlu0 %v875
    %v877 = vpop.xlane.xlu0 %876
    %v878 = vrcp.pop %v874
    %v879 = vmul.f32 %v869, %v878
    %v880 = vrcp.pop %v877
    %v881 = vmul.f32 %v871, %v880
    %884 = vrot.lane.b32.xlu0 %v165, 96
    %v885 = vpop.permute.xlu0 %884
    %886 = vrot.lane.b32.xlu0 %v171, 96
    %v887 = vpop.permute.xlu0 %886
    %v891 = vsel %vm263, %v879, 0
    %v894 = vsel %vm263, %v881, 0
    %896 = vmatprep.subr.mxu0 0.0
    %897 = vmatpush1.msra.mxu0 %v885
    %898 = vmatprep.subr.mxu0 0.0
    %899 = vmatpush1.msra.mxu0 %v887
    %900 = vmatprep.subr.mxu0 0.0
    %901 = vmatpush1.msra.mxu0 0.0
    %902 = vmatprep.subr.mxu0 0.0
    %903 = vmatpush1.msra.mxu0 0.0
    %904 = vmatprep.subr.mxu0 0.0
    %905 = vmatpush1.msra.mxu0 0.0
    %906 = vmatprep.subr.mxu0 0.0
    %907 = vmatpush1.msra.mxu0 0.0
    %908 = vmatprep.subr.mxu0 0.0
    %909 = vmatpush1.msra.mxu0 0.0
    %910 = vmatprep.subr.mxu0 0.0
    %911 = vmatpush1.msra.mxu0 0.0
    %912 = vmatprep.subr.mxu0 0.0
    %913 = vmatpush1.msra.mxu0 0.0
    %914 = vmatprep.subr.mxu0 0.0
    %915 = vmatpush1.msra.mxu0 0.0
    %916 = vmatprep.subr.mxu0 0.0
    %917 = vmatpush1.msra.mxu0 0.0
    %918 = vmatprep.subr.mxu0 0.0
    %919 = vmatpush1.msra.mxu0 0.0
    %920 = vmatprep.subr.mxu0 0.0
    %921 = vmatpush1.msra.mxu0 0.0
    %922 = vmatprep.subr.mxu0 0.0
    %923 = vmatpush1.msra.mxu0 0.0
    %924 = vmatprep.subr.mxu0 0.0
    %925 = vmatpush1.msra.mxu0 0.0
    %926 = vmatprep.subr.mxu0 0.0
    %927 = vmatpush1.msra.mxu0 0.0
    %928 = vmatprep.subr.mxu0 0.0
    %929 = vmatpush1.msra.mxu0 0.0
    %930 = vmatprep.subr.mxu0 0.0
    %931 = vmatpush1.msra.mxu0 0.0
    %932 = vmatprep.subr.mxu0 0.0
    %933 = vmatpush1.msra.mxu0 0.0
    %934 = vmatprep.subr.mxu0 0.0
    %935 = vmatpush1.msra.mxu0 0.0
    %936 = vmatprep.subr.mxu0 0.0
    %937 = vmatpush1.msra.mxu0 0.0
    %938 = vmatprep.subr.mxu0 0.0
    %939 = vmatpush1.msra.mxu0 0.0
    %940 = vmatprep.subr.mxu0 0.0
    %941 = vmatpush1.msra.mxu0 0.0
    %942 = vmatprep.subr.mxu0 0.0
    %943 = vmatpush1.msra.mxu0 0.0
    %944 = vmatprep.subr.mxu0 0.0
    %945 = vmatpush1.msra.mxu0 0.0
    %946 = vmatprep.subr.mxu0 0.0
    %947 = vmatpush1.msra.mxu0 0.0
    %948 = vmatprep.subr.mxu0 0.0
    %949 = vmatpush1.msra.mxu0 0.0
    %950 = vmatprep.subr.mxu0 0.0
    %951 = vmatpush1.msra.mxu0 0.0
    %952 = vmatprep.subr.mxu0 0.0
    %953 = vmatpush1.msra.mxu0 0.0
    %954 = vmatprep.subr.mxu0 0.0
    %955 = vmatpush1.msra.mxu0 0.0
    %956 = vmatprep.subr.mxu0 0.0
    %957 = vmatpush1.msra.mxu0 0.0
    %958 = vmatprep.subr.mxu0 0.0
    %959 = vmatpush1.msra.mxu0 0.0
    %960 = vmatprep.mubr.f32.mxu0 0.0
    %961 = vmatmul.mubr.f32.gmra.mrb[0].mxu0 %v891
    %v962 = vpop.f32.mrb[0].mxu0
    %v963 = vadd.f32 0.0, %v962
    %v964 = vpop.f32.mrb[0].mxu0
    %965 = vmatprep.mubr.f32.mxu0 0.0
    %966 = vmatmul.mubr.f32.gmra.mrb[0].mxu0 %v894
    %v967 = vpop.f32.mrb[0].mxu0
    %v968 = vadd.f32 0.0, %v967
    %v969 = vpop.f32.mrb[0].mxu0
    %970 = vdwg.mxu0
    %v971 = vadd.f32 %v767, %v963
    %v972 = vadd.f32 %v768, %v968
    %v973 = vadd.f32 %v21, %v971
    %v974 = vadd.f32 %v22, %v972
    %v975 = vld [vmem:[%s3 + $0x1] sm:$0x1]
    %v977 = vlaneseq
    %v978 = vshrl.u32 %v977, 7
    %v979 = vsub.s32 0, %v978
    %v980 = vrot.slane %v975, %v979
    %981 = vrot.lane.b32.xlu0 %v980, 64
    %v982 = vpop.permute.xlu0 %981
    %v984 = vadd.f32 %v973, %v982
    %v985 = vadd.f32 %v974, %v982
    %v986 = vsel %vm25, %v984, 0.0
    %987 = vadd.xlane.f32.xlu0 %v986
    %v988 = vpop.xlane.xlu0 %987
    %v989 = vsel %vm25, %v985, 0.0
    %990 = vadd.xlane.f32.xlu0 %v989
    %v991 = vpop.xlane.xlu0 %990
    %v992 = vmul.f32 %v988, %v32
    %v993 = vmul.f32 %v991, %v32
    %v994 = vsub.f32 %v984, %v992
    %v995 = vsub.f32 %v985, %v993
    %v996 = vmul.f32 %v994, %v994
    %v997 = vmul.f32 %v995, %v995
    %v998 = vsel %vm25, %v996, 0.0
    %999 = vadd.xlane.f32.xlu0 %v998
    %v1000 = vpop.xlane.xlu0 %999
    %v1001 = vsel %vm25, %v997, 0.0
    %1002 = vadd.xlane.f32.xlu0 %v1001
    %v1003 = vpop.xlane.xlu0 %1002
    %v1004 = vmul.f32 %v1000, %v45
    %v1005 = vmul.f32 %v1003, %v45
    %v1006 = vrsqrt.pop %v1004
    %v1007 = vmul.f32 %v1004, %v1006
    %vm1008 = vcmp.eq.f32.partialorder %v1004, inf
    %v1009 = vsel %vm1008, %v1004, %v1007
    %vm1010 = vcmp.eq.f32.partialorder %v1004, 0.0
    %v1011 = vand.u32 %v1004, 2147483648
    %v1012 = vsel %vm1010, %v1011, %v1009
    %v1013 = vrsqrt.pop %v1005
    %v1014 = vmul.f32 %v1005, %v1013
    %vm1015 = vcmp.eq.f32.partialorder %v1005, inf
    %v1016 = vsel %vm1015, %v1005, %v1014
    %vm1017 = vcmp.eq.f32.partialorder %v1005, 0.0
    %v1018 = vand.u32 %v1005, 2147483648
    %v1019 = vsel %vm1017, %v1018, %v1016
    %v1020 = vadd.f32 %v1012, 1e-06
    %v1021 = vadd.f32 %v1019, 1e-06
    %v1022 = vrcp.pop %v1020
    %v1023 = vmul.f32 %v994, %v1022
    %v1024 = vrcp.pop %v1021
    %v1025 = vmul.f32 %v995, %v1024
    %v1026 = vadd.f32 %v1023, 1.0
    %v1027 = vadd.f32 %v1025, 1.0
    %v1028 = vld [vmem:[%s3 + $0x1] sm:$0x3]
    %v1030 = vlaneseq
    %v1031 = vshrl.u32 %v1030, 7
    %v1032 = vsub.s32 0, %v1031
    %v1033 = vrot.slane %v1028, %v1032
    %v1034 = vlaneseq
    %v1035 = vshrl.u32 %v1034, 7
    %v1036 = vsub.s32 1, %v1035
    %v1037 = vrot.slane %v1028, %v1036
    %1042 = vrot.lane.b32.xlu0 %v71, 64
    %v1043 = vpop.permute.xlu0 %1042
    %1044 = vrot.lane.b32.xlu0 %v73, 64
    %v1045 = vpop.permute.xlu0 %1044
    %1046 = vrot.lane.b32.xlu0 %v75, 64
    %v1047 = vpop.permute.xlu0 %1046
    %1048 = vrot.lane.b32.xlu0 %v77, 64
    %v1049 = vpop.permute.xlu0 %1048
    %1054 = vrot.lane.b32.xlu0 %v1033, 32
    %v1055 = vpop.permute.xlu0 %1054
    %1056 = vrot.lane.b32.xlu0 %v1037, 32
    %v1057 = vpop.permute.xlu0 %1056
    %v1058 = vsel %vm25, %v1055, %v1057
    %v1061 = vsel %vm25, %v1026, 0
    %v1064 = vsel %vm25, %v1027, 0
    %1066 = vmatprep.subr.mxu0 0.0
    %1067 = vmatpush1.msra.mxu0 %v1043
    %1068 = vmatprep.subr.mxu0 0.0
    %1069 = vmatpush1.msra.mxu0 %v1045
    %1070 = vmatprep.subr.mxu0 0.0
    %1071 = vmatpush1.msra.mxu0 %v1047
    %1072 = vmatprep.subr.mxu0 0.0
    %1073 = vmatpush1.msra.mxu0 %v1049
    %1074 = vmatprep.subr.mxu0 0.0
    %1075 = vmatpush1.msra.mxu0 0.0
    %1076 = vmatprep.subr.mxu0 0.0
    %1077 = vmatpush1.msra.mxu0 0.0
    %1078 = vmatprep.subr.mxu0 0.0
    %1079 = vmatpush1.msra.mxu0 0.0
    %1080 = vmatprep.subr.mxu0 0.0
    %1081 = vmatpush1.msra.mxu0 0.0
    %1082 = vmatprep.subr.mxu0 0.0
    %1083 = vmatpush1.msra.mxu0 0.0
    %1084 = vmatprep.subr.mxu0 0.0
    %1085 = vmatpush1.msra.mxu0 0.0
    %1086 = vmatprep.subr.mxu0 0.0
    %1087 = vmatpush1.msra.mxu0 0.0
    %1088 = vmatprep.subr.mxu0 0.0
    %1089 = vmatpush1.msra.mxu0 0.0
    %1090 = vmatprep.subr.mxu0 0.0
    %1091 = vmatpush1.msra.mxu0 0.0
    %1092 = vmatprep.subr.mxu0 0.0
    %1093 = vmatpush1.msra.mxu0 0.0
    %1094 = vmatprep.subr.mxu0 0.0
    %1095 = vmatpush1.msra.mxu0 0.0
    %1096 = vmatprep.subr.mxu0 0.0
    %1097 = vmatpush1.msra.mxu0 0.0
    %1098 = vmatprep.subr.mxu0 0.0
    %1099 = vmatpush1.msra.mxu0 0.0
    %1100 = vmatprep.subr.mxu0 0.0
    %1101 = vmatpush1.msra.mxu0 0.0
    %1102 = vmatprep.subr.mxu0 0.0
    %1103 = vmatpush1.msra.mxu0 0.0
    %1104 = vmatprep.subr.mxu0 0.0
    %1105 = vmatpush1.msra.mxu0 0.0
    %1106 = vmatprep.subr.mxu0 0.0
    %1107 = vmatpush1.msra.mxu0 0.0
    %1108 = vmatprep.subr.mxu0 0.0
    %1109 = vmatpush1.msra.mxu0 0.0
    %1110 = vmatprep.subr.mxu0 0.0
    %1111 = vmatpush1.msra.mxu0 0.0
    %1112 = vmatprep.subr.mxu0 0.0
    %1113 = vmatpush1.msra.mxu0 0.0
    %1114 = vmatprep.subr.mxu0 0.0
    %1115 = vmatpush1.msra.mxu0 0.0
    %1116 = vmatprep.subr.mxu0 0.0
    %1117 = vmatpush1.msra.mxu0 0.0
    %1118 = vmatprep.subr.mxu0 0.0
    %1119 = vmatpush1.msra.mxu0 0.0
    %1120 = vmatprep.subr.mxu0 0.0
    %1121 = vmatpush1.msra.mxu0 0.0
    %1122 = vmatprep.subr.mxu0 0.0
    %1123 = vmatpush1.msra.mxu0 0.0
    %1124 = vmatprep.subr.mxu0 0.0
    %1125 = vmatpush1.msra.mxu0 0.0
    %1126 = vmatprep.subr.mxu0 0.0
    %1127 = vmatpush1.msra.mxu0 0.0
    %1128 = vmatprep.subr.mxu0 0.0
    %1129 = vmatpush1.msra.mxu0 0.0
    %1130 = vmatprep.mubr.f32.mxu0 0.0
    %1131 = vmatmul.mubr.f32.gmra.mrb[0].mxu0 %v1061
    %v1132 = vpop.f32.mrb[0].mxu0
    %v1133 = vadd.f32 %v1058, %v1132
    %v1134 = vpop.f32.mrb[0].mxu0
    %1135 = vmatprep.mubr.f32.mxu0 0.0
    %1136 = vmatmul.mubr.f32.gmra.mrb[0].mxu0 %v1064
    %v1137 = vpop.f32.mrb[0].mxu0
    %v1138 = vadd.f32 %v1058, %v1137
    %v1139 = vpop.f32.mrb[0].mxu0
    %1140 = vdwg.mxu0
    %v1141 = vmax.f32 %v1133, 0.0
    %v1142 = vmax.f32 %v1138, 0.0
    %v1143 = vld [vmem:[%s4] sm:$0xff]
    %v1144 = vld [vmem:[%s4 + $0x8] sm:$0xff]
    %v1145 = vld [vmem:[%s4 + $0x10] sm:$0xff]
    %v1146 = vld [vmem:[%s4 + $0x18] sm:$0xff]
    %v1147 = vld [vmem:[%s4 + $0x20] sm:$0xff]
    %v1148 = vld [vmem:[%s4 + $0x28] sm:$0xff]
    %v1149 = vld [vmem:[%s4 + $0x30] sm:$0xff]
    %v1150 = vld [vmem:[%s4 + $0x38] sm:$0xff]
    %v1151 = vld [vmem:[%s3 + $0x2] sm:$0x1]
    %v1153 = vlaneseq
    %v1154 = vshrl.u32 %v1153, 7
    %v1155 = vsub.s32 0, %v1154
    %v1156 = vrot.slane %v1151, %v1155
    %1157 = vrot.lane.b32.xlu0 %v1156, 96
    %v1158 = vpop.permute.xlu0 %1157
    %vm1160 = vcmask 523264
    %v1162 = vsel %vm1160, %v1141, 0
    %v1165 = vsel %vm1160, %v1142, 0
    %1167 = vmatprep.subr.mxu0 0.0
    %1168 = vmatpush1.msra.mxu0 %v1143
    %1169 = vmatprep.subr.mxu0 0.0
    %1170 = vmatpush1.msra.mxu0 %v1144
    %1171 = vmatprep.subr.mxu0 0.0
    %1172 = vmatpush1.msra.mxu0 %v1145
    %1173 = vmatprep.subr.mxu0 0.0
    %1174 = vmatpush1.msra.mxu0 %v1146
    %1175 = vmatprep.subr.mxu0 0.0
    %1176 = vmatpush1.msra.mxu0 %v1147
    %1177 = vmatprep.subr.mxu0 0.0
    %1178 = vmatpush1.msra.mxu0 %v1148
    %1179 = vmatprep.subr.mxu0 0.0
    %1180 = vmatpush1.msra.mxu0 %v1149
    %1181 = vmatprep.subr.mxu0 0.0
    %1182 = vmatpush1.msra.mxu0 %v1150
    %1183 = vmatprep.subr.mxu0 0.0
    %1184 = vmatpush1.msra.mxu0 0.0
    %1185 = vmatprep.subr.mxu0 0.0
    %1186 = vmatpush1.msra.mxu0 0.0
    %1187 = vmatprep.subr.mxu0 0.0
    %1188 = vmatpush1.msra.mxu0 0.0
    %1189 = vmatprep.subr.mxu0 0.0
    %1190 = vmatpush1.msra.mxu0 0.0
    %1191 = vmatprep.subr.mxu0 0.0
    %1192 = vmatpush1.msra.mxu0 0.0
    %1193 = vmatprep.subr.mxu0 0.0
    %1194 = vmatpush1.msra.mxu0 0.0
    %1195 = vmatprep.subr.mxu0 0.0
    %1196 = vmatpush1.msra.mxu0 0.0
    %1197 = vmatprep.subr.mxu0 0.0
    %1198 = vmatpush1.msra.mxu0 0.0
    %1199 = vmatprep.subr.mxu0 0.0
    %1200 = vmatpush1.msra.mxu0 0.0
    %1201 = vmatprep.subr.mxu0 0.0
    %1202 = vmatpush1.msra.mxu0 0.0
    %1203 = vmatprep.subr.mxu0 0.0
    %1204 = vmatpush1.msra.mxu0 0.0
    %1205 = vmatprep.subr.mxu0 0.0
    %1206 = vmatpush1.msra.mxu0 0.0
    %1207 = vmatprep.subr.mxu0 0.0
    %1208 = vmatpush1.msra.mxu0 0.0
    %1209 = vmatprep.subr.mxu0 0.0
    %1210 = vmatpush1.msra.mxu0 0.0
    %1211 = vmatprep.subr.mxu0 0.0
    %1212 = vmatpush1.msra.mxu0 0.0
    %1213 = vmatprep.subr.mxu0 0.0
    %1214 = vmatpush1.msra.mxu0 0.0
    %1215 = vmatprep.subr.mxu0 0.0
    %1216 = vmatpush1.msra.mxu0 0.0
    %1217 = vmatprep.subr.mxu0 0.0
    %1218 = vmatpush1.msra.mxu0 0.0
    %1219 = vmatprep.subr.mxu0 0.0
    %1220 = vmatpush1.msra.mxu0 0.0
    %1221 = vmatprep.subr.mxu0 0.0
    %1222 = vmatpush1.msra.mxu0 0.0
    %1223 = vmatprep.subr.mxu0 0.0
    %1224 = vmatpush1.msra.mxu0 0.0
    %1225 = vmatprep.subr.mxu0 0.0
    %1226 = vmatpush1.msra.mxu0 0.0
    %1227 = vmatprep.subr.mxu0 0.0
    %1228 = vmatpush1.msra.mxu0 0.0
    %1229 = vmatprep.subr.mxu0 0.0
    %1230 = vmatpush1.msra.mxu0 0.0
    %1231 = vmatprep.mubr.f32.mxu0 0.0
    %1232 = vmatmul.mubr.f32.gmra.mrb[0].mxu0 %v1162
    %v1233 = vpop.f32.mrb[0].mxu0
    %v1234 = vadd.f32 %v1158, %v1233
    %v1235 = vpop.f32.mrb[0].mxu0
    %1236 = vmatprep.mubr.f32.mxu0 0.0
    %1237 = vmatmul.mubr.f32.gmra.mrb[0].mxu0 %v1165
    %v1238 = vpop.f32.mrb[0].mxu0
    %v1239 = vadd.f32 %v1158, %v1238
    %v1240 = vpop.f32.mrb[0].mxu0
    %1241 = vdwg.mxu0
    %v1242 = vadd.f32 %v984, %v1234
    %v1243 = vadd.f32 %v985, %v1239
    %1244 = vst.msk [vmem:[#allocation2] sm:$0xff] %vm25, %v1242
    %1245 = vst.msk [vmem:[#allocation2 + $0x8] sm:$0xff] %vm25, %v1243
    // Predicated region
    $region22: #{tpu_custom_call.1} parent=1 // pred_check
      _
    $region23: #{tpu_custom_call.1} parent=1 // pred_check_branch
      %1247 = sbr.rel (0) target = $region25
    $region24: #{tpu_custom_call.1} parent=1 // pred_region
      %s1249 = ssub.s32 256, 256
      %1250 = vsyncadd [#allocation3], %s1249
      %s1251 = sshll.u32 [#allocation2], 4
      %s1252 = int_to_ptr.vmem [resolvable:$true] %s1251
      %1257 = dma.vmem_to_hbm [thread:$0]  %s1252, 256, %s5, [#allocation3], 128, 128, 8
    $region25: #{tpu_custom_call.1} parent=1 // pred_fallthru
      _
    // Predicated region
    $region26: #{tpu_custom_call.1} parent=1 // pred_check
      _
    $region27: #{tpu_custom_call.1} parent=1 // pred_check_branch
      %1259 = sbr.rel (0) target = $region29
    $region28: #{tpu_custom_call.1} parent=1 // pred_region
      %1260 = dma.done [#allocation3], 256
    $region29: #{tpu_custom_call.1} parent=1 // pred_fallthru
      _
    %1261 = vsyncpa [#allocation3], 1

</llo_original>
